<compile_context>
chip_gen: v7x
topology: tpu7x:2x2x1
jax: 0.10.0
libtpu: 0.0.40
codegen_flags: <defaults>
</compile_context>

<pallas_src>
import math

import jax
import jax.numpy as jnp
from jax.experimental import pallas as pl
from jax.experimental.pallas import tpu as pltpu

_LANES = 128
_TARGET_CHUNK_BYTES = 4 << 20   # per-DMA chunk size target (~4 MiB)
_MAX_CHUNKS = 16                # cap on concurrently in-flight DMAs


def _resolve_shape(numel, shape):
    shape = list(shape)
    if shape.count(-1) > 1:
        raise ValueError("only one -1 allowed in view shape")
    if -1 in shape:
        known = 1
        for s in shape:
            if s != -1:
                known *= s
        if known == 0 or numel % known != 0:
            raise ValueError(f"cannot view {numel} elements as {tuple(shape)}")
        shape[shape.index(-1)] = numel // known
    if math.prod(shape) != numel:
        raise ValueError(f"cannot view {numel} elements as {tuple(shape)}")
    return tuple(shape)


def _sublane_pack(dtype):
    # Sublane multiple for tile-aligned DMA chunks: 8 rows for 4-byte dtypes,
    # 16 for 2-byte (bf16), 32 for 1-byte (int8/fp8).
    itemsize = jnp.dtype(dtype).itemsize
    return max(8, 32 // max(itemsize, 1))


def _make_dma_copy_kernel(num_chunks, chunk_rows, rows):
    """Kernel that copies a (rows, width) HBM slab to the HBM output via DMA."""

    def kernel(x_hbm, o_hbm, sems):
        copies = []
        for c in range(num_chunks):          # static Python loop (few chunks)
            start = c * chunk_rows
            size = min(chunk_rows, rows - start)
            cp = pltpu.make_async_copy(
                x_hbm.at[pl.ds(start, size), :],
                o_hbm.at[pl.ds(start, size), :],
                sems.at[c],
            )
            cp.start()                       # all chunks in flight at once
            copies.append(cp)
        for cp in copies:
            cp.wait()

    return kernel


def pallas_view(x, shape, *, materialize=False):
    """Equivalent of torch View(shape).forward(x) == x.view(*shape).

    materialize=False (default): zero-copy metadata reshape (fastest, and
    exactly what torch.view is). materialize=True: produce a fresh HBM copy
    via a Pallas HBM->HBM DMA kernel.
    """
    numel = x.size
    out_shape = _resolve_shape(numel, shape)

    if not materialize:
        # view is metadata-only: skip the copy entirely.
        return x.reshape(out_shape)

    itemsize = jnp.dtype(x.dtype).itemsize
    if numel == 0 or numel % _LANES != 0:
        # TODO(synk): ragged (numel % 128 != 0) / empty sizes skip the Pallas
        # copy; the metadata reshape matches torch.view semantics exactly.
        return x.reshape(out_shape)

    # Lane-dense slab: widest lane dimension the element count allows.
    width = _LANES
    for cand in (2048, 1024, 512, 256):
        if numel % cand == 0:
            width = cand
            break
    rows = numel // width
    slab = x.reshape(rows, width)  # contiguous row-major == torch memory order

    # Split the slab into a few large, tile-aligned DMA chunks so several
    # DMAs are in flight at once (no VMEM staging, no per-step overhead).
    total_bytes = numel * itemsize
    pack = _sublane_pack(x.dtype)
    num_chunks = max(1, -(-total_bytes // _TARGET_CHUNK_BYTES))
    num_chunks = min(num_chunks, _MAX_CHUNKS, max(1, rows // pack))
    chunk_rows = -(-rows // num_chunks)
    chunk_rows = -(-chunk_rows // pack) * pack   # sublane-aligned chunk rows
    chunk_rows = min(chunk_rows, rows)
    num_chunks = -(-rows // chunk_rows)

    kernel = _make_dma_copy_kernel(num_chunks, chunk_rows, rows)

    copied = pl.pallas_call(
        kernel,
        out_shape=jax.ShapeDtypeStruct((rows, width), x.dtype),
        in_specs=[pl.BlockSpec(memory_space=pl.ANY)],    # raw HBM ref, no auto-DMA
        out_specs=pl.BlockSpec(memory_space=pl.ANY),     # raw HBM ref, no auto-DMA
        scratch_shapes=[pltpu.SemaphoreType.DMA((num_chunks,))],
        compiler_params=pltpu.CompilerParams(has_side_effects=True),
        cost_estimate=pl.CostEstimate(
            flops=0,
            transcendentals=0,
            bytes_accessed=2 * total_bytes,
        ),
    )(slab)

    return copied.reshape(out_shape)


if __name__ == "__main__":
    key = jax.random.PRNGKey(0)

    # NCHW-style input, as the conv feature map a View layer typically flattens.
    x = jax.random.normal(key, (2, 4, 16, 16), dtype=jnp.float32)
    ref = x.reshape(2, -1)

    # Default path: zero-copy metadata reshape (exactly torch.view).
    y = jax.block_until_ready(pallas_view(x, (2, -1)))
    assert y.shape == (2, 4 * 16 * 16), y.shape
    assert y.dtype == x.dtype
    assert bool(jnp.array_equal(y, ref))

    # Materializing path: runs the Pallas HBM->HBM DMA copy kernel.
    y_copy = jax.block_until_ready(pallas_view(x, (2, -1), materialize=True))
    assert y_copy.shape == (2, 4 * 16 * 16), y_copy.shape
    assert y_copy.dtype == x.dtype
    assert bool(jnp.array_equal(y_copy, ref))

    # Larger slab (8 MiB): exercises the multi-chunk (several DMAs in flight) path.
    x2 = jax.random.normal(jax.random.PRNGKey(1), (8, 32, 64, 128),
                           dtype=jnp.float32)
    y2 = jax.block_until_ready(pallas_view(x2, (-1, 64 * 128), materialize=True))
    assert y2.shape == (8 * 32, 64 * 128)
    assert bool(jnp.array_equal(y2, x2.reshape(-1, 64 * 128)))

    # Ragged numel: falls back to the pure-metadata reshape even when asked
    # to materialize.
    x3 = jax.random.normal(jax.random.PRNGKey(2), (2, 3, 5), dtype=jnp.float32)
    y3 = jax.block_until_ready(pallas_view(x3, (6, 5), materialize=True))
    assert y3.shape == (6, 5)
    assert bool(jnp.array_equal(y3, x3.reshape(6, 5)))

    print("KERNEL_OK")
</pallas_src>

<mosaic_0001>
module attributes {stable_mosaic.version = 11 : i64} {
  func.func @kernel(%arg0: memref<1x2048xf32, #tpu.memory_space<any>>, %arg1: memref<1x2048xf32, #tpu.memory_space<any>>, %arg2: memref<1x!tpu.dma_semaphore, #tpu.memory_space<semaphore_mem>>) attributes {dimension_semantics = [], scalar_prefetch = 0 : i64, scratch_operands = 1 : i64, tpu.core_type = #tpu.core_type<tc>} {
    %c0_i32 = arith.constant 0 : i32
    %c0_i32_0 = arith.constant 0 : i32
    %c0_i32_1 = arith.constant 0 : i32
    %0 = tpu.memref_slice %arg0[%c0_i32_0, %c0_i32_1] : memref<1x2048xf32, #tpu.memory_space<any>> -> memref<1x2048xf32, #tpu.memory_space<any>>
    %c0_i32_2 = arith.constant 0 : i32
    %c0_i32_3 = arith.constant 0 : i32
    %1 = tpu.memref_slice %arg1[%c0_i32_2, %c0_i32_3] : memref<1x2048xf32, #tpu.memory_space<any>> -> memref<1x2048xf32, #tpu.memory_space<any>>
    %2 = tpu.memref_slice %arg2[%c0_i32] : memref<1x!tpu.dma_semaphore, #tpu.memory_space<semaphore_mem>> -> memref<1x!tpu.dma_semaphore, #tpu.memory_space<semaphore_mem>>
    %3 = tpu.memref_squeeze %2 : memref<1x!tpu.dma_semaphore, #tpu.memory_space<semaphore_mem>> -> memref<!tpu.dma_semaphore, #tpu.memory_space<semaphore_mem>>
    tpu.enqueue_dma source(%0 : memref<1x2048xf32, #tpu.memory_space<any>>) target(%1 : memref<1x2048xf32, #tpu.memory_space<any>>) target_semaphore(%3 : memref<!tpu.dma_semaphore, #tpu.memory_space<semaphore_mem>>)
    %c0_i32_4 = arith.constant 0 : i32
    %c0_i32_5 = arith.constant 0 : i32
    %c0_i32_6 = arith.constant 0 : i32
    %4 = tpu.memref_slice %arg0[%c0_i32_5, %c0_i32_6] : memref<1x2048xf32, #tpu.memory_space<any>> -> memref<1x2048xf32, #tpu.memory_space<any>>
    %c0_i32_7 = arith.constant 0 : i32
    %c0_i32_8 = arith.constant 0 : i32
    %5 = tpu.memref_slice %arg1[%c0_i32_7, %c0_i32_8] : memref<1x2048xf32, #tpu.memory_space<any>> -> memref<1x2048xf32, #tpu.memory_space<any>>
    %6 = tpu.memref_slice %arg2[%c0_i32_4] : memref<1x!tpu.dma_semaphore, #tpu.memory_space<semaphore_mem>> -> memref<1x!tpu.dma_semaphore, #tpu.memory_space<semaphore_mem>>
    %7 = tpu.memref_squeeze %6 : memref<1x!tpu.dma_semaphore, #tpu.memory_space<semaphore_mem>> -> memref<!tpu.dma_semaphore, #tpu.memory_space<semaphore_mem>>
    tpu.wait_dma2 semaphore(%7 : memref<!tpu.dma_semaphore, #tpu.memory_space<semaphore_mem>>) src(%4 : memref<1x2048xf32, #tpu.memory_space<any>>) dst(%5 : memref<1x2048xf32, #tpu.memory_space<any>>)
    return
  }
}

</mosaic_0001>

<llo_original>
// kernel: tpu_custom_call.1
$region0: #{tpu_custom_call.1}
  #allocation0 [shape = 'u32[]', space=smem, size = 0x4, offset = 0x4, fixed_abs, tag = 'smem constant byte address 0x4 - core index']
  #allocation1 [shape = 'u32[144,128]{1,0:T(1,128)}', space=vmem, size = 0x12000, scoped, tag = 'internal scratch']
  #allocation2 [shape = 's32[1]{0}', space=sflag, size = 0x4, scoped, tag = 'scratch operand']
  #allocation3 [shape = 's32[]', space=sflag, size = 0x4, offset = 0, fixed_abs, tag = 'sflag constant byte address 0x0 - dummy sync flag']
  #allocation4 [shape = 'u32[0]{0}', space=smem, size = 0, offset = 0, fixed_abs, tag = 'smem constant byte address 0x0 - null']
  %s0 = inlined_call_operand.hbm [shape: f32[1,2048], index: 0, kind: input, shape index: {}]
  %s1 = inlined_call_operand.hbm [shape: f32[1,2048], index: 1, kind: output, shape index: {}]
  %s2 = sld [smem:[#allocation0]]
  $region2: #{tpu_custom_call.1} parent=0
    _
  %s4 = ssub.s32 1, %s2
  %s5 = scalar_select 0, %s4, %s2
  %s7 = sshll.u32 1, 14
  %s8 = sxor.u32 4294967295, %s7
  %s11 = sshll.u32 3, 24
  %s12 = sxor.u32 4294967295, %s11
  %s13 = sand.u32 0, %s12
  %s15 = sor.u32 %s13, 0
  %18 = dma.general %s0, 256, %s1, [#allocation2], [#allocation3], [#allocation4], %s15, 0
  %s19 = smul.u32 1, 16
  %s20 = sshll.u32 %s19, 4
  %21 = dma.done [#allocation2], %s20
  %22 = vsyncmov [#allocation2]
  %s23 = vpop.sfrf %22
  %p24 = scmp.eq.s32.totalorder %s23, 0
  %p25 = pneg %p24
  %27 = shalt.err (%p25)

</llo_original>
